<compile_context>
chip_gen: v7x
topology: tpu7x:2x2x1
jax: 0.10.0
libtpu: 0.0.40
codegen_flags: <defaults>
</compile_context>

<pallas_src>
import functools

import numpy as np
import jax
import jax.numpy as jnp
from jax.experimental import pallas as pl
from jax.experimental.pallas import tpu as pltpu


def _round_up(x, m):
    return (x + m - 1) // m * m


def _gauss_smooth_kernel(body_ref, halo_ref, out_ref, *, groups, out_w):
    """One (tile_h, out_w) output tile of the replication-padded 5x5 conv.

    body_ref: (tile_h, Wp)  rows [t*tile_h, (t+1)*tile_h) of the edge-padded input
    halo_ref: (8, Wp)       rows [(t+1)*tile_h, (t+1)*tile_h + 8) (4 used)
    out_ref : (tile_h, out_w)
    groups  : tuple of (weight_value, ((dy, dx), ...)) baked at trace time
    """
    tile_h, wp = body_ref.shape
    n_strips = tile_h // 8

    # Stream over 8-row output strips so the 12-row window + accumulator stay
    # in vregs for all 25 taps (one store / output vreg instead of ~25).
    for s in range(n_strips):
        r0 = s * 8
        if s < n_strips - 1:
            win = body_ref[r0:r0 + 12, :]                       # (12, Wp)
        else:
            # Last strip: 8 rows from body + 4-row bottom halo (tiny concat).
            win = jnp.concatenate(
                [body_ref[r0:r0 + 8, :], halo_ref[0:4, :]], axis=0)

        # 5 horizontal taps via lane rolls (XLU slot).  Wrap-around only
        # pollutes lanes >= W, which are cropped by the wrapper.
        shifted = [win]
        for dx in range(1, 5):
            shifted.append(pltpu.roll(win, shift=wp - dx, axis=1))

        # Accumulate grouped by distinct tap value (6 groups for the Gaussian).
        acc = None
        for wval, positions in groups:
            gsum = None
            for (dy, dx) in positions:
                term = shifted[dx][dy:dy + 8, :]
                gsum = term if gsum is None else gsum + term
            contrib = gsum * jnp.float32(wval)
            acc = contrib if acc is None else acc + contrib

        out_ref[r0:r0 + 8, :] = acc[:, :out_w]


def gauss_smooth(x, weights):
    """x: (N, C, H, W) float32 (C == 1 for the module).

    weights: concrete (5, 5) array (numpy / non-traced); baked into the kernel
    as constants and grouped by equal value at trace time.
    """
    assert x.ndim == 4
    N, C, H, W = x.shape
    NC = N * C
    x = x.astype(jnp.float32)

    # Bake taps as Python constants, grouped by distinct value (symmetry).
    w_np = np.asarray(weights, dtype=np.float32).reshape(5, 5)
    groups_d = {}
    for dy in range(5):
        for dx in range(5):
            groups_d.setdefault(float(w_np[dy, dx]), []).append((dy, dx))
    groups = tuple((v, tuple(p)) for v, p in groups_d.items())

    # Lane-dense widths: Wp holds data + left/right replication (+2 each side),
    # out_W is the lane-dense output width (crop is a no-op when W % 128 == 0).
    Wp = _round_up(W + 4, 128)
    out_W = _round_up(W, 128)

    # H tile: multiple of 8; keep double-buffered body+halo+out under ~8 MiB
    # so the scoped-VMEM defaults on v5e/v6e/v7x are never exceeded.
    tile_h = min(128, _round_up(H, 8), max(8, (524288 // Wp) // 8 * 8))
    num_h = pl.cdiv(H, tile_h)
    Hp_out = num_h * tile_h
    Hp_in = Hp_out + 8          # room for the always-in-bounds 8-row halo block

    # Single edge-mode pad: top/left by 2, bottom/right up to the tiled sizes.
    # Rows/cols beyond the true +2 replication only feed cropped outputs.
    xf = x.reshape(NC, H, W)
    xp = jnp.pad(xf, ((0, 0), (2, Hp_in - H - 2), (2, Wp - W - 2)), mode="edge")

    body_spec = pl.BlockSpec((None, tile_h, Wp), lambda n, t: (n, t, 0))
    halo_spec = pl.BlockSpec((None, 8, Wp),
                             lambda n, t: (n, (t + 1) * (tile_h // 8), 0))
    out_spec = pl.BlockSpec((None, tile_h, out_W), lambda n, t: (n, t, 0))

    out = pl.pallas_call(
        functools.partial(_gauss_smooth_kernel, groups=groups, out_w=out_W),
        grid=(NC, num_h),
        in_specs=[body_spec, halo_spec],
        out_specs=out_spec,
        out_shape=jax.ShapeDtypeStruct((NC, Hp_out, out_W), jnp.float32),
        compiler_params=pltpu.CompilerParams(
            dimension_semantics=("parallel", "parallel"),
        ),
    )(xp, xp)

    return out[:, :H, :W].reshape(N, C, H, W)


def gauss_smooth_reference(x, weights):
    """Plain-JAX reference mirroring the PyTorch module (for verification)."""
    xp = jnp.pad(x, ((0, 0), (0, 0), (2, 2), (2, 2)), mode="edge")
    H, W = x.shape[2], x.shape[3]
    out = jnp.zeros_like(x)
    w = jnp.asarray(weights, jnp.float32)
    for dy in range(5):
        for dx in range(5):
            out = out + w[dy, dx] * xp[:, :, dy:dy + H, dx:dx + W]
    return out


if __name__ == "__main__":
    # Fixed Gaussian taps, as set in Gauss_Smooth.__init__ (trainable=False).
    ker = np.array(
        [[0.000874, 0.006976, 0.01386, 0.006976, 0.000874],
         [0.006976, 0.0557, 0.110656, 0.0557, 0.006976],
         [0.01386, 0.110656, 0.219833, 0.110656, 0.01386],
         [0.006976, 0.0557, 0.110656, 0.0557, 0.006976],
         [0.000874, 0.006976, 0.01386, 0.006976, 0.000874]],
        dtype=np.float32,
    )

    # Module operates on single-channel 4D tensors (in_channels=1).
    key = jax.random.PRNGKey(0)
    x = jax.random.normal(key, (2, 1, 16, 16), dtype=jnp.float32)

    smooth_fn = jax.jit(functools.partial(gauss_smooth, weights=ker))
    smoothed = jax.block_until_ready(smooth_fn(x))

    ref = gauss_smooth_reference(x, ker)
    assert smoothed.shape == x.shape
    assert jnp.allclose(smoothed, ref, atol=1e-5, rtol=1e-5), float(
        jnp.max(jnp.abs(smoothed - ref)))

    print("KERNEL_OK")
</pallas_src>

<mosaic_0001>
module attributes {stable_mosaic.version = 11 : i64} {
  func.func @_gauss_smooth_kernel(%arg0: i32, %arg1: i32, %arg2: memref<1x16x128xf32, #tpu.memory_space<vmem>>, %arg3: memref<1x8x128xf32, #tpu.memory_space<vmem>>, %arg4: memref<1x16x128xf32, #tpu.memory_space<vmem>>) attributes {dimension_semantics = [#tpu.dimension_semantics<parallel>, #tpu.dimension_semantics<parallel>], iteration_bounds = array<i64: 2, 1>, scalar_prefetch = 0 : i64, scratch_operands = 0 : i64, tpu.core_type = #tpu.core_type<tc>, window_params = [{transform_indices = @transform_0, window_bounds = array<i64: 1, 16, 128>}, {transform_indices = @transform_1, window_bounds = array<i64: 1, 8, 128>}, {transform_indices = @transform_2, window_bounds = array<i64: 1, 16, 128>}]} {
    %c0 = arith.constant 0 : index
    %c0_0 = arith.constant 0 : index
    %c0_1 = arith.constant 0 : index
    %0 = vector.load %arg2[%c0, %c0_0, %c0_1] : memref<1x16x128xf32, #tpu.memory_space<vmem>>, vector<1x12x128xf32>
    %1 = vector.shape_cast %0 : vector<1x12x128xf32> to vector<12x128xf32>
    %c127_i32 = arith.constant 127 : i32
    %2 = tpu.dynamic_rotate %1 by %c127_i32 dim 1 : vector<12x128xf32>, i32 -> vector<12x128xf32>
    %c126_i32 = arith.constant 126 : i32
    %3 = tpu.dynamic_rotate %1 by %c126_i32 dim 1 : vector<12x128xf32>, i32 -> vector<12x128xf32>
    %c125_i32 = arith.constant 125 : i32
    %4 = tpu.dynamic_rotate %1 by %c125_i32 dim 1 : vector<12x128xf32>, i32 -> vector<12x128xf32>
    %c124_i32 = arith.constant 124 : i32
    %5 = tpu.dynamic_rotate %1 by %c124_i32 dim 1 : vector<12x128xf32>, i32 -> vector<12x128xf32>
    %6 = vector.extract_strided_slice %1 {offsets = [0, 0], sizes = [8, 128], strides = [1, 1]} : vector<12x128xf32> to vector<8x128xf32>
    %7 = vector.extract_strided_slice %5 {offsets = [0, 0], sizes = [8, 128], strides = [1, 1]} : vector<12x128xf32> to vector<8x128xf32>
    %8 = arith.addf %6, %7 : vector<8x128xf32>
    %9 = vector.extract_strided_slice %1 {offsets = [4, 0], sizes = [8, 128], strides = [1, 1]} : vector<12x128xf32> to vector<8x128xf32>
    %10 = arith.addf %8, %9 : vector<8x128xf32>
    %11 = vector.extract_strided_slice %5 {offsets = [4, 0], sizes = [8, 128], strides = [1, 1]} : vector<12x128xf32> to vector<8x128xf32>
    %12 = arith.addf %10, %11 : vector<8x128xf32>
    %cst = arith.constant 8.740000e-04 : f32
    %13 = vector.broadcast %cst : f32 to vector<8x128xf32>
    %14 = arith.mulf %12, %13 : vector<8x128xf32>
    %15 = vector.extract_strided_slice %2 {offsets = [0, 0], sizes = [8, 128], strides = [1, 1]} : vector<12x128xf32> to vector<8x128xf32>
    %16 = vector.extract_strided_slice %4 {offsets = [0, 0], sizes = [8, 128], strides = [1, 1]} : vector<12x128xf32> to vector<8x128xf32>
    %17 = arith.addf %15, %16 : vector<8x128xf32>
    %18 = vector.extract_strided_slice %1 {offsets = [1, 0], sizes = [8, 128], strides = [1, 1]} : vector<12x128xf32> to vector<8x128xf32>
    %19 = arith.addf %17, %18 : vector<8x128xf32>
    %20 = vector.extract_strided_slice %5 {offsets = [1, 0], sizes = [8, 128], strides = [1, 1]} : vector<12x128xf32> to vector<8x128xf32>
    %21 = arith.addf %19, %20 : vector<8x128xf32>
    %22 = vector.extract_strided_slice %1 {offsets = [3, 0], sizes = [8, 128], strides = [1, 1]} : vector<12x128xf32> to vector<8x128xf32>
    %23 = arith.addf %21, %22 : vector<8x128xf32>
    %24 = vector.extract_strided_slice %5 {offsets = [3, 0], sizes = [8, 128], strides = [1, 1]} : vector<12x128xf32> to vector<8x128xf32>
    %25 = arith.addf %23, %24 : vector<8x128xf32>
    %26 = vector.extract_strided_slice %2 {offsets = [4, 0], sizes = [8, 128], strides = [1, 1]} : vector<12x128xf32> to vector<8x128xf32>
    %27 = arith.addf %25, %26 : vector<8x128xf32>
    %28 = vector.extract_strided_slice %4 {offsets = [4, 0], sizes = [8, 128], strides = [1, 1]} : vector<12x128xf32> to vector<8x128xf32>
    %29 = arith.addf %27, %28 : vector<8x128xf32>
    %cst_2 = arith.constant 6.976000e-03 : f32
    %30 = vector.broadcast %cst_2 : f32 to vector<8x128xf32>
    %31 = arith.mulf %29, %30 : vector<8x128xf32>
    %32 = arith.addf %14, %31 : vector<8x128xf32>
    %33 = vector.extract_strided_slice %3 {offsets = [0, 0], sizes = [8, 128], strides = [1, 1]} : vector<12x128xf32> to vector<8x128xf32>
    %34 = vector.extract_strided_slice %1 {offsets = [2, 0], sizes = [8, 128], strides = [1, 1]} : vector<12x128xf32> to vector<8x128xf32>
    %35 = arith.addf %33, %34 : vector<8x128xf32>
    %36 = vector.extract_strided_slice %5 {offsets = [2, 0], sizes = [8, 128], strides = [1, 1]} : vector<12x128xf32> to vector<8x128xf32>
    %37 = arith.addf %35, %36 : vector<8x128xf32>
    %38 = vector.extract_strided_slice %3 {offsets = [4, 0], sizes = [8, 128], strides = [1, 1]} : vector<12x128xf32> to vector<8x128xf32>
    %39 = arith.addf %37, %38 : vector<8x128xf32>
    %cst_3 = arith.constant 1.386000e-02 : f32
    %40 = vector.broadcast %cst_3 : f32 to vector<8x128xf32>
    %41 = arith.mulf %39, %40 : vector<8x128xf32>
    %42 = arith.addf %32, %41 : vector<8x128xf32>
    %43 = vector.extract_strided_slice %2 {offsets = [1, 0], sizes = [8, 128], strides = [1, 1]} : vector<12x128xf32> to vector<8x128xf32>
    %44 = vector.extract_strided_slice %4 {offsets = [1, 0], sizes = [8, 128], strides = [1, 1]} : vector<12x128xf32> to vector<8x128xf32>
    %45 = arith.addf %43, %44 : vector<8x128xf32>
    %46 = vector.extract_strided_slice %2 {offsets = [3, 0], sizes = [8, 128], strides = [1, 1]} : vector<12x128xf32> to vector<8x128xf32>
    %47 = arith.addf %45, %46 : vector<8x128xf32>
    %48 = vector.extract_strided_slice %4 {offsets = [3, 0], sizes = [8, 128], strides = [1, 1]} : vector<12x128xf32> to vector<8x128xf32>
    %49 = arith.addf %47, %48 : vector<8x128xf32>
    %cst_4 = arith.constant 5.570000e-02 : f32
    %50 = vector.broadcast %cst_4 : f32 to vector<8x128xf32>
    %51 = arith.mulf %49, %50 : vector<8x128xf32>
    %52 = arith.addf %42, %51 : vector<8x128xf32>
    %53 = vector.extract_strided_slice %3 {offsets = [1, 0], sizes = [8, 128], strides = [1, 1]} : vector<12x128xf32> to vector<8x128xf32>
    %54 = vector.extract_strided_slice %2 {offsets = [2, 0], sizes = [8, 128], strides = [1, 1]} : vector<12x128xf32> to vector<8x128xf32>
    %55 = arith.addf %53, %54 : vector<8x128xf32>
    %56 = vector.extract_strided_slice %4 {offsets = [2, 0], sizes = [8, 128], strides = [1, 1]} : vector<12x128xf32> to vector<8x128xf32>
    %57 = arith.addf %55, %56 : vector<8x128xf32>
    %58 = vector.extract_strided_slice %3 {offsets = [3, 0], sizes = [8, 128], strides = [1, 1]} : vector<12x128xf32> to vector<8x128xf32>
    %59 = arith.addf %57, %58 : vector<8x128xf32>
    %cst_5 = arith.constant 1.106560e-01 : f32
    %60 = vector.broadcast %cst_5 : f32 to vector<8x128xf32>
    %61 = arith.mulf %59, %60 : vector<8x128xf32>
    %62 = arith.addf %52, %61 : vector<8x128xf32>
    %63 = vector.extract_strided_slice %3 {offsets = [2, 0], sizes = [8, 128], strides = [1, 1]} : vector<12x128xf32> to vector<8x128xf32>
    %cst_6 = arith.constant 2.198330e-01 : f32
    %64 = vector.broadcast %cst_6 : f32 to vector<8x128xf32>
    %65 = arith.mulf %63, %64 : vector<8x128xf32>
    %66 = arith.addf %62, %65 : vector<8x128xf32>
    %c0_7 = arith.constant 0 : index
    %c0_8 = arith.constant 0 : index
    %c0_9 = arith.constant 0 : index
    %67 = vector.load %arg4[%c0_7, %c0_8, %c0_9] : memref<1x16x128xf32, #tpu.memory_space<vmem>>, vector<1x8x128xf32>
    %68 = vector.shape_cast %67 : vector<1x8x128xf32> to vector<8x128xf32>
    %69 = vector.shape_cast %66 : vector<8x128xf32> to vector<1x8x128xf32>
    tpu.vector_store %arg4[%c0_7, %c0_8, %c0_9], %69 {strides = array<i32>} : memref<1x16x128xf32, #tpu.memory_space<vmem>>, vector<1x8x128xf32>,
    %c0_10 = arith.constant 0 : index
    %c8 = arith.constant 8 : index
    %c0_11 = arith.constant 0 : index
    %70 = vector.load %arg2[%c0_10, %c8, %c0_11] : memref<1x16x128xf32, #tpu.memory_space<vmem>>, vector<1x8x128xf32>
    %71 = vector.shape_cast %70 : vector<1x8x128xf32> to vector<8x128xf32>
    %c0_12 = arith.constant 0 : index
    %c0_13 = arith.constant 0 : index
    %c0_14 = arith.constant 0 : index
    %72 = vector.load %arg3[%c0_12, %c0_13, %c0_14] : memref<1x8x128xf32, #tpu.memory_space<vmem>>, vector<1x4x128xf32>
    %73 = vector.shape_cast %72 : vector<1x4x128xf32> to vector<4x128xf32>
    %74 = tpu.concatenate %71, %73 in 0 : vector<8x128xf32>, vector<4x128xf32> -> vector<12x128xf32>
    %c127_i32_15 = arith.constant 127 : i32
    %75 = tpu.dynamic_rotate %74 by %c127_i32_15 dim 1 : vector<12x128xf32>, i32 -> vector<12x128xf32>
    %c126_i32_16 = arith.constant 126 : i32
    %76 = tpu.dynamic_rotate %74 by %c126_i32_16 dim 1 : vector<12x128xf32>, i32 -> vector<12x128xf32>
    %c125_i32_17 = arith.constant 125 : i32
    %77 = tpu.dynamic_rotate %74 by %c125_i32_17 dim 1 : vector<12x128xf32>, i32 -> vector<12x128xf32>
    %c124_i32_18 = arith.constant 124 : i32
    %78 = tpu.dynamic_rotate %74 by %c124_i32_18 dim 1 : vector<12x128xf32>, i32 -> vector<12x128xf32>
    %79 = vector.extract_strided_slice %74 {offsets = [0, 0], sizes = [8, 128], strides = [1, 1]} : vector<12x128xf32> to vector<8x128xf32>
    %80 = vector.extract_strided_slice %78 {offsets = [0, 0], sizes = [8, 128], strides = [1, 1]} : vector<12x128xf32> to vector<8x128xf32>
    %81 = arith.addf %79, %80 : vector<8x128xf32>
    %82 = vector.extract_strided_slice %74 {offsets = [4, 0], sizes = [8, 128], strides = [1, 1]} : vector<12x128xf32> to vector<8x128xf32>
    %83 = arith.addf %81, %82 : vector<8x128xf32>
    %84 = vector.extract_strided_slice %78 {offsets = [4, 0], sizes = [8, 128], strides = [1, 1]} : vector<12x128xf32> to vector<8x128xf32>
    %85 = arith.addf %83, %84 : vector<8x128xf32>
    %cst_19 = arith.constant 8.740000e-04 : f32
    %86 = vector.broadcast %cst_19 : f32 to vector<8x128xf32>
    %87 = arith.mulf %85, %86 : vector<8x128xf32>
    %88 = vector.extract_strided_slice %75 {offsets = [0, 0], sizes = [8, 128], strides = [1, 1]} : vector<12x128xf32> to vector<8x128xf32>
    %89 = vector.extract_strided_slice %77 {offsets = [0, 0], sizes = [8, 128], strides = [1, 1]} : vector<12x128xf32> to vector<8x128xf32>
    %90 = arith.addf %88, %89 : vector<8x128xf32>
    %91 = vector.extract_strided_slice %74 {offsets = [1, 0], sizes = [8, 128], strides = [1, 1]} : vector<12x128xf32> to vector<8x128xf32>
    %92 = arith.addf %90, %91 : vector<8x128xf32>
    %93 = vector.extract_strided_slice %78 {offsets = [1, 0], sizes = [8, 128], strides = [1, 1]} : vector<12x128xf32> to vector<8x128xf32>
    %94 = arith.addf %92, %93 : vector<8x128xf32>
    %95 = vector.extract_strided_slice %74 {offsets = [3, 0], sizes = [8, 128], strides = [1, 1]} : vector<12x128xf32> to vector<8x128xf32>
    %96 = arith.addf %94, %95 : vector<8x128xf32>
    %97 = vector.extract_strided_slice %78 {offsets = [3, 0], sizes = [8, 128], strides = [1, 1]} : vector<12x128xf32> to vector<8x128xf32>
    %98 = arith.addf %96, %97 : vector<8x128xf32>
    %99 = vector.extract_strided_slice %75 {offsets = [4, 0], sizes = [8, 128], strides = [1, 1]} : vector<12x128xf32> to vector<8x128xf32>
    %100 = arith.addf %98, %99 : vector<8x128xf32>
    %101 = vector.extract_strided_slice %77 {offsets = [4, 0], sizes = [8, 128], strides = [1, 1]} : vector<12x128xf32> to vector<8x128xf32>
    %102 = arith.addf %100, %101 : vector<8x128xf32>
    %cst_20 = arith.constant 6.976000e-03 : f32
    %103 = vector.broadcast %cst_20 : f32 to vector<8x128xf32>
    %104 = arith.mulf %102, %103 : vector<8x128xf32>
    %105 = arith.addf %87, %104 : vector<8x128xf32>
    %106 = vector.extract_strided_slice %76 {offsets = [0, 0], sizes = [8, 128], strides = [1, 1]} : vector<12x128xf32> to vector<8x128xf32>
    %107 = vector.extract_strided_slice %74 {offsets = [2, 0], sizes = [8, 128], strides = [1, 1]} : vector<12x128xf32> to vector<8x128xf32>
    %108 = arith.addf %106, %107 : vector<8x128xf32>
    %109 = vector.extract_strided_slice %78 {offsets = [2, 0], sizes = [8, 128], strides = [1, 1]} : vector<12x128xf32> to vector<8x128xf32>
    %110 = arith.addf %108, %109 : vector<8x128xf32>
    %111 = vector.extract_strided_slice %76 {offsets = [4, 0], sizes = [8, 128], strides = [1, 1]} : vector<12x128xf32> to vector<8x128xf32>
    %112 = arith.addf %110, %111 : vector<8x128xf32>
    %cst_21 = arith.constant 1.386000e-02 : f32
    %113 = vector.broadcast %cst_21 : f32 to vector<8x128xf32>
    %114 = arith.mulf %112, %113 : vector<8x128xf32>
    %115 = arith.addf %105, %114 : vector<8x128xf32>
    %116 = vector.extract_strided_slice %75 {offsets = [1, 0], sizes = [8, 128], strides = [1, 1]} : vector<12x128xf32> to vector<8x128xf32>
    %117 = vector.extract_strided_slice %77 {offsets = [1, 0], sizes = [8, 128], strides = [1, 1]} : vector<12x128xf32> to vector<8x128xf32>
    %118 = arith.addf %116, %117 : vector<8x128xf32>
    %119 = vector.extract_strided_slice %75 {offsets = [3, 0], sizes = [8, 128], strides = [1, 1]} : vector<12x128xf32> to vector<8x128xf32>
    %120 = arith.addf %118, %119 : vector<8x128xf32>
    %121 = vector.extract_strided_slice %77 {offsets = [3, 0], sizes = [8, 128], strides = [1, 1]} : vector<12x128xf32> to vector<8x128xf32>
    %122 = arith.addf %120, %121 : vector<8x128xf32>
    %cst_22 = arith.constant 5.570000e-02 : f32
    %123 = vector.broadcast %cst_22 : f32 to vector<8x128xf32>
    %124 = arith.mulf %122, %123 : vector<8x128xf32>
    %125 = arith.addf %115, %124 : vector<8x128xf32>
    %126 = vector.extract_strided_slice %76 {offsets = [1, 0], sizes = [8, 128], strides = [1, 1]} : vector<12x128xf32> to vector<8x128xf32>
    %127 = vector.extract_strided_slice %75 {offsets = [2, 0], sizes = [8, 128], strides = [1, 1]} : vector<12x128xf32> to vector<8x128xf32>
    %128 = arith.addf %126, %127 : vector<8x128xf32>
    %129 = vector.extract_strided_slice %77 {offsets = [2, 0], sizes = [8, 128], strides = [1, 1]} : vector<12x128xf32> to vector<8x128xf32>
    %130 = arith.addf %128, %129 : vector<8x128xf32>
    %131 = vector.extract_strided_slice %76 {offsets = [3, 0], sizes = [8, 128], strides = [1, 1]} : vector<12x128xf32> to vector<8x128xf32>
    %132 = arith.addf %130, %131 : vector<8x128xf32>
    %cst_23 = arith.constant 1.106560e-01 : f32
    %133 = vector.broadcast %cst_23 : f32 to vector<8x128xf32>
    %134 = arith.mulf %132, %133 : vector<8x128xf32>
    %135 = arith.addf %125, %134 : vector<8x128xf32>
    %136 = vector.extract_strided_slice %76 {offsets = [2, 0], sizes = [8, 128], strides = [1, 1]} : vector<12x128xf32> to vector<8x128xf32>
    %cst_24 = arith.constant 2.198330e-01 : f32
    %137 = vector.broadcast %cst_24 : f32 to vector<8x128xf32>
    %138 = arith.mulf %136, %137 : vector<8x128xf32>
    %139 = arith.addf %135, %138 : vector<8x128xf32>
    %c0_25 = arith.constant 0 : index
    %c8_26 = arith.constant 8 : index
    %c0_27 = arith.constant 0 : index
    %140 = vector.load %arg4[%c0_25, %c8_26, %c0_27] : memref<1x16x128xf32, #tpu.memory_space<vmem>>, vector<1x8x128xf32>
    %141 = vector.shape_cast %140 : vector<1x8x128xf32> to vector<8x128xf32>
    %142 = vector.shape_cast %139 : vector<8x128xf32> to vector<1x8x128xf32>
    tpu.vector_store %arg4[%c0_25, %c8_26, %c0_27], %142 {strides = array<i32>} : memref<1x16x128xf32, #tpu.memory_space<vmem>>, vector<1x8x128xf32>,
    return
  }
  func.func @transform_0(%arg0: i32, %arg1: i32) -> (i32, i32, i32) {
    %c0_i32 = arith.constant 0 : i32
    %c0_i32_0 = arith.constant 0 : i32
    return %arg0, %arg1, %c0_i32 : i32, i32, i32
  }
  func.func @transform_1(%arg0: i32, %arg1: i32) -> (i32, i32, i32) {
    %c1_i32 = arith.constant 1 : i32
    %0 = arith.addi %arg1, %c1_i32 : i32
    %c2_i32 = arith.constant 2 : i32
    %1 = arith.muli %0, %c2_i32 : i32
    %c0_i32 = arith.constant 0 : i32
    %c0_i32_0 = arith.constant 0 : i32
    return %arg0, %1, %c0_i32 : i32, i32, i32
  }
  func.func @transform_2(%arg0: i32, %arg1: i32) -> (i32, i32, i32) {
    %c0_i32 = arith.constant 0 : i32
    %c0_i32_0 = arith.constant 0 : i32
    return %arg0, %arg1, %c0_i32 : i32, i32, i32
  }
}

</mosaic_0001>

<llo_original>
// kernel: gauss_smooth.1
$region0: #{gauss_smooth.1}
  #allocation0 [shape = 'u32[]', space=smem, size = 0x4, offset = 0x4, fixed_abs, tag = 'smem constant byte address 0x4 - core index']
  #allocation1 [shape = 'u32[144,128]{1,0:T(1,128)}', space=vmem, size = 0x12000, scoped, tag = 'internal scratch']
  %s0 = inlined_call_operand.vmem [shape: f32[2,24,128], index: 0, kind: input, shape index: {}, may-alias: {0,1}]
  %s1 = inlined_call_operand.vmem [shape: f32[2,24,128], index: 1, kind: input, shape index: {}, may-alias: {0,1}]
  %s2 = inlined_call_operand.vmem [shape: f32[2,16,128], index: 2, kind: output, shape index: {}]
  %s3 = sld [smem:[#allocation0]]
  $region41: #{gauss_smooth.1} parent=0
    _
  %s5 = ssub.s32 1, %s3
  %s6 = scalar_select 0, %s5, %s3
  loop: start=0, step=1, limit=4
  $region2: #{gauss_smooth.1} parent=0 // loop_pre_header
    _
  $region3: #{gauss_smooth.1} parent=0 // loop_header
    %s8 = sphi 0, %s12
    %p9 = scmp.ge.s32.totalorder %s8, 4
    %s15 = sphi 0, %s27
    %s16 = sphi 0, %s23
    %s17 = sphi 0, %s15
    %s18 = sphi 0, %s16
    %s19 = sphi 0, %s17
    %s20 = sphi 0, %s18
    %s32 = sphi 0, %s34
    %s35 = sphi 0, %s32
    %s36 = sphi 0, %s35
    %s52 = sphi 0, %s36
    %s64 = sphi 0, %s66
    %s67 = sphi 0, %s64
    %s68 = sphi 0, %s67
    %s84 = sphi 0, %s68
    %s92 = sphi 0, %s94
    %s95 = sphi 0, %s92
    %s96 = sphi 0, %s95
    %s112 = sphi 0, %s96
  $region4: #{gauss_smooth.1} parent=0 // loop_header_branch
    %11 = sbr.rel (%p9) target = $region8
  $region5: #{gauss_smooth.1} parent=0 // loop_body
    %s13 = ssub.s32 %s8, 1
    %s14 = ssub.s32 %s8, 2
    %s21 = sadd.s32 1, %s16
    %p22 = scmp.ge.s32.totalorder %s21, 1
    %s23 = scalar_select %p22, 0, %s21
    %s24 = sadd.s32 1, %s15
    %s25 = scalar_select %p22, %s24, %s15
    %p26 = scmp.ge.s32.totalorder %s25, 2
    %s27 = scalar_select %p26, 0, %s25
    %s28 = ssub.s32 %s15, %s27
    %s29 = ssub.s32 %s16, %s23
    %s30 = sor.u32 %s28, %s29
    %p31 = scmp.eq.s32.totalorder %s30, 0
    %s33 = sadd.s32 %s32, 1
    %s34 = scalar_select %p31, %s32, %s33
    %p37 = pneg %p31
    %p38 = scmp.eq.s32.totalorder %s8, 1
    %p39 = por %p37, %p38
    %p40 = scmp.ne.s32.totalorder %s32, %s35
    %p41 = scmp.eq.s32.totalorder %s8, 0
    %p42 = por %p40, %p41
    %p43 = scmp.ne.s32.totalorder %s32, %s35
    %p44 = scmp.eq.s32.totalorder %s13, 1
    %p45 = por %p43, %p44
    %p46 = scmp.ne.s32.totalorder %s35, %s36
    %p47 = scmp.eq.s32.totalorder %s13, 0
    %p48 = por %p46, %p47
    %p49 = scmp.ne.s32.totalorder %s35, %s36
    %p50 = scmp.eq.s32.totalorder %s14, 1
    %p51 = por %p49, %p50
    %p53 = scmp.ne.s32.totalorder %s36, %s52
    %p54 = scmp.eq.s32.totalorder %s14, 0
    %p55 = por %p53, %p54
    %s56 = sadd.s32 %s16, 1
    %s57 = smul.u32 %s56, 2
    %s58 = sadd.s32 %s23, 1
    %s59 = smul.u32 %s58, 2
    %s60 = ssub.s32 %s15, %s27
    %s61 = ssub.s32 %s57, %s59
    %s62 = sor.u32 %s60, %s61
    %p63 = scmp.eq.s32.totalorder %s62, 0
    %s65 = sadd.s32 %s64, 1
    %s66 = scalar_select %p63, %s64, %s65
    %p69 = pneg %p63
    %p70 = scmp.eq.s32.totalorder %s8, 1
    %p71 = por %p69, %p70
    %p72 = scmp.ne.s32.totalorder %s64, %s67
    %p73 = scmp.eq.s32.totalorder %s8, 0
    %p74 = por %p72, %p73
    %p75 = scmp.ne.s32.totalorder %s64, %s67
    %p76 = scmp.eq.s32.totalorder %s13, 1
    %p77 = por %p75, %p76
    %p78 = scmp.ne.s32.totalorder %s67, %s68
    %p79 = scmp.eq.s32.totalorder %s13, 0
    %p80 = por %p78, %p79
    %p81 = scmp.ne.s32.totalorder %s67, %s68
    %p82 = scmp.eq.s32.totalorder %s14, 1
    %p83 = por %p81, %p82
    %p85 = scmp.ne.s32.totalorder %s68, %s84
    %p86 = scmp.eq.s32.totalorder %s14, 0
    %p87 = por %p85, %p86
    %s88 = ssub.s32 %s15, %s27
    %s89 = ssub.s32 %s16, %s23
    %s90 = sor.u32 %s88, %s89
    %p91 = scmp.eq.s32.totalorder %s90, 0
    %s93 = sadd.s32 %s92, 1
    %s94 = scalar_select %p91, %s92, %s93
    %p97 = pneg %p91
    %p98 = scmp.eq.s32.totalorder %s8, 1
    %p99 = por %p97, %p98
    %p100 = scmp.ne.s32.totalorder %s92, %s95
    %p101 = scmp.eq.s32.totalorder %s8, 0
    %p102 = por %p100, %p101
    %p103 = scmp.ne.s32.totalorder %s92, %s95
    %p104 = scmp.eq.s32.totalorder %s13, 1
    %p105 = por %p103, %p104
    %p106 = scmp.ne.s32.totalorder %s95, %s96
    %p107 = scmp.eq.s32.totalorder %s13, 0
    %p108 = por %p106, %p107
    %p109 = scmp.ne.s32.totalorder %s95, %s96
    %p110 = scmp.eq.s32.totalorder %s14, 1
    %p111 = por %p109, %p110
    %p113 = scmp.ne.s32.totalorder %s96, %s112
    %p114 = scmp.eq.s32.totalorder %s14, 0
    %p115 = por %p113, %p114
    %p116 = scmp.le.s32.totalorder 1, %s8
    %p117 = scmp.lt.s32.totalorder %s8, 3
    %p118 = pnand %p116, %p117
    %p119 = pneg %p118
    // Predicated region
    $region9: #{gauss_smooth.1} parent=5 // pred_check
      _
    $region10: #{gauss_smooth.1} parent=5 // pred_check_branch
      %121 = sbr.rel (%p118) target = $region12
    $region11: #{gauss_smooth.1} parent=5 // pred_region
      %s122 = ssub.s32 %s8, 1
    $region12: #{gauss_smooth.1} parent=5 // pred_fallthru
      _
    %p123 = scmp.lt.s32.totalorder %s8, 2
    // Predicated region
    $region13: #{gauss_smooth.1} parent=5 // pred_check
      %p124 = pneg %p123
    $region14: #{gauss_smooth.1} parent=5 // pred_check_branch
      %126 = sbr.rel (%p124) target = $region16
    $region15: #{gauss_smooth.1} parent=5 // pred_region
      // Predicated region
      $region17: #{gauss_smooth.1} parent=15 // pred_check
        %p127 = pneg %p42
      $region18: #{gauss_smooth.1} parent=15 // pred_check_branch
        %129 = sbr.rel (%p127) target = $region20
      $region19: #{gauss_smooth.1} parent=15 // pred_region
        %s130 = smul.u32 2, %s16
        %s131 = ssub.s32 3, %s130
        %p132 = scmp.lt.s32.totalorder %s131, 2
        %s133 = scalar_select %p132, %s131, 2
        %s134 = smul.u32 128, %s133
        %p135 = scmp.lt.s32.totalorder %s15, 1
        %s136 = scalar_select %p135, %s15, 1
        %p137 = scmp.lt.s32.totalorder %s130, 2
        %s138 = scalar_select %p137, %s130, 2
        %s139 = smul.addr %s136, 3
        %s140 = sadd.s32 %s138, %s139
        %s141 = smul.addr %s140, 8
        %s142 = scalar_lea.vmem %s0, %s141
        %s143 = smul.u32 2, %s16
        %s144 = ssub.s32 3, %s143
        %p145 = scmp.lt.s32.totalorder %s144, 2
        %s146 = scalar_select %p145, %s144, 2
        %s147 = smul.u32 128, %s146
      $region20: #{gauss_smooth.1} parent=15 // pred_fallthru
        _
      // Predicated region
      $region21: #{gauss_smooth.1} parent=15 // pred_check
        %p148 = pneg %p74
      $region22: #{gauss_smooth.1} parent=15 // pred_check_branch
        %150 = sbr.rel (%p148) target = $region24
      $region23: #{gauss_smooth.1} parent=15 // pred_region
        %s151 = sadd.s32 %s16, 1
        %s152 = smul.u32 %s151, 2
        %p153 = scmp.lt.s32.totalorder %s15, 1
        %s154 = scalar_select %p153, %s15, 1
        %p155 = scmp.lt.s32.totalorder %s152, 2
        %s156 = scalar_select %p155, %s152, 2
        %s157 = smul.addr %s154, 3
        %s158 = sadd.s32 %s156, %s157
        %s159 = smul.addr %s158, 8
        %s160 = scalar_lea.vmem %s1, %s159
        %s161 = sadd.s32 %s16, 1
        %s162 = smul.u32 %s161, 2
      $region24: #{gauss_smooth.1} parent=15 // pred_fallthru
        _
    $region16: #{gauss_smooth.1} parent=5 // pred_fallthru
      _
    %p163 = scmp.le.s32.totalorder 1, %s8
    %p164 = scmp.lt.s32.totalorder %s8, 3
    %p165 = pnand %p163, %p164
    %p166 = pneg %p165
    // Predicated region
    $region25: #{gauss_smooth.1} parent=5 // pred_check
      _
    $region26: #{gauss_smooth.1} parent=5 // pred_check_branch
      %168 = sbr.rel (%p165) target = $region28
    $region27: #{gauss_smooth.1} parent=5 // pred_region
      %s169 = ssub.s32 %s8, 1
      %s170 = smul.u32 2, %s18
      %s171 = ssub.s32 3, %s170
      %p172 = scmp.lt.s32.totalorder %s171, 2
      %s173 = scalar_select %p172, %s171, 2
      %s174 = smul.u32 128, %s173
      %p175 = scmp.lt.s32.totalorder %s17, 1
      %s176 = scalar_select %p175, %s17, 1
      %p177 = scmp.lt.s32.totalorder %s170, 2
      %s178 = scalar_select %p177, %s170, 2
      %s179 = smul.addr %s176, 3
      %s180 = sadd.s32 %s178, %s179
      %s181 = smul.addr %s180, 8
      %s182 = scalar_lea.vmem %s0, %s181
      %p183 = pneg %p48
      %p184 = pneg %p45
      %s185 = sadd.s32 %s18, 1
      %s186 = smul.u32 %s185, 2
      %p187 = scmp.lt.s32.totalorder %s17, 1
      %s188 = scalar_select %p187, %s17, 1
      %p189 = scmp.lt.s32.totalorder %s186, 2
      %s190 = scalar_select %p189, %s186, 2
      %s191 = smul.addr %s188, 3
      %s192 = sadd.s32 %s190, %s191
      %s193 = smul.addr %s192, 8
      %s194 = scalar_lea.vmem %s1, %s193
      %p195 = pneg %p80
      %p196 = pneg %p77
      %p197 = pneg %p108
      %p198 = pneg %p105
      %s199 = smul.u32 2, %s18
      %p200 = scmp.lt.s32.totalorder %s17, 1
      %s201 = scalar_select %p200, %s17, 1
      %p202 = scmp.lt.s32.totalorder %s199, 1
      %s203 = scalar_select %p202, %s199, 1
      %s204 = smul.addr %s201, 2
      %s205 = sadd.s32 %s203, %s204
      %s206 = smul.addr %s205, 8
      %s207 = scalar_lea.vmem %s2, %s206
      %s208 = smul.u32 2, %s18
      %s209 = ssub.s32 3, %s208
      %p210 = scmp.lt.s32.totalorder %s209, 2
      %s211 = scalar_select %p210, %s209, 2
      %s212 = smul.u32 128, %s211
      %p213 = scmp.lt.s32.totalorder %s17, 1
      %s214 = scalar_select %p213, %s17, 1
      %p215 = scmp.lt.s32.totalorder %s208, 2
      %s216 = scalar_select %p215, %s208, 2
      %s217 = smul.addr %s214, 3
      %s218 = sadd.s32 %s216, %s217
      %s219 = smul.addr %s218, 8
      %s220 = scalar_lea.vmem %s0, %s219
      %s221 = smul.u32 2, %s18
      %s222 = ssub.s32 3, %s221
      %p223 = scmp.lt.s32.totalorder %s222, 2
      %s224 = scalar_select %p223, %s222, 2
      %s225 = smul.u32 128, %s224
      %s226 = sadd.s32 %s18, 1
      %s227 = smul.u32 %s226, 2
      %p228 = scmp.lt.s32.totalorder %s17, 1
      %s229 = scalar_select %p228, %s17, 1
      %p230 = scmp.lt.s32.totalorder %s227, 2
      %s231 = scalar_select %p230, %s227, 2
      %s232 = smul.addr %s229, 3
      %s233 = sadd.s32 %s231, %s232
      %s234 = smul.addr %s233, 8
      %s235 = scalar_lea.vmem %s1, %s234
      %s236 = sadd.s32 %s18, 1
      %s237 = smul.u32 %s236, 2
      %s238 = smul.u32 2, %s18
      %p239 = scmp.lt.s32.totalorder %s17, 1
      %s240 = scalar_select %p239, %s17, 1
      %p241 = scmp.lt.s32.totalorder %s238, 1
      %s242 = scalar_select %p241, %s238, 1
      %s243 = smul.addr %s240, 2
      %s244 = sadd.s32 %s242, %s243
      %s245 = smul.addr %s244, 8
      %s246 = scalar_lea.vmem %s2, %s245
      %s247 = smul.u32 2, %s18
      %v248 = vld [vmem:[%s220] sm:$0xff]
      %v249 = vld [vmem:[%s220 + $0x8] sm:$0xf]
      %250 = vrot.lane.b32.xlu0 %v248, 127
      %v251 = vpop.permute.xlu0 %250
      %252 = vrot.lane.b32.xlu0 %v249, 127
      %v253 = vpop.permute.xlu0 %252
      %254 = vrot.lane.b32.xlu0 %v248, 126
      %v255 = vpop.permute.xlu0 %254
      %256 = vrot.lane.b32.xlu0 %v249, 126
      %v257 = vpop.permute.xlu0 %256
      %258 = vrot.lane.b32.xlu0 %v248, 125
      %v259 = vpop.permute.xlu0 %258
      %260 = vrot.lane.b32.xlu0 %v249, 125
      %v261 = vpop.permute.xlu0 %260
      %262 = vrot.lane.b32.xlu0 %v248, 124
      %v263 = vpop.permute.xlu0 %262
      %264 = vrot.lane.b32.xlu0 %v249, 124
      %v265 = vpop.permute.xlu0 %264
      %v266 = vadd.f32 %v248, %v263
      %vm269 = vcmask 1043456
      %v270 = vrot.slane %v248, 4
      %v271 = vrot.slane %v249, 4
      %v272 = vsel %vm269, %v270, %v271
      %v274 = vadd.f32 %v266, %v272
      %v277 = vrot.slane %v263, 4
      %v278 = vrot.slane %v265, 4
      %v279 = vsel %vm269, %v277, %v278
      %v281 = vadd.f32 %v274, %v279
      %v282 = vmul.f32 %v281, 0.000874
      %v283 = vadd.f32 %v251, %v259
      %vm284 = vcmask 1046528
      %v285 = vrot.slane %v248, 1
      %v286 = vrot.slane %v249, 1
      %v287 = vsel %vm284, %v285, %v286
      %v289 = vadd.f32 %v283, %v287
      %v290 = vrot.slane %v263, 1
      %v291 = vrot.slane %v265, 1
      %v292 = vsel %vm284, %v290, %v291
      %v294 = vadd.f32 %v289, %v292
      %vm295 = vcmask 1044480
      %v296 = vrot.slane %v248, 3
      %v297 = vrot.slane %v249, 3
      %v298 = vsel %vm295, %v296, %v297
      %v300 = vadd.f32 %v294, %v298
      %v301 = vrot.slane %v263, 3
      %v302 = vrot.slane %v265, 3
      %v303 = vsel %vm295, %v301, %v302
      %v305 = vadd.f32 %v300, %v303
      %v308 = vrot.slane %v251, 4
      %v309 = vrot.slane %v253, 4
      %v310 = vsel %vm269, %v308, %v309
      %v312 = vadd.f32 %v305, %v310
      %v315 = vrot.slane %v259, 4
      %v316 = vrot.slane %v261, 4
      %v317 = vsel %vm269, %v315, %v316
      %v319 = vadd.f32 %v312, %v317
      %v320 = vmul.f32 %v319, 0.006976
      %v321 = vadd.f32 %v282, %v320
      %vm322 = vcmask 1045504
      %v323 = vrot.slane %v248, 2
      %v324 = vrot.slane %v249, 2
      %v325 = vsel %vm322, %v323, %v324
      %v327 = vadd.f32 %v255, %v325
      %v328 = vrot.slane %v263, 2
      %v329 = vrot.slane %v265, 2
      %v330 = vsel %vm322, %v328, %v329
      %v332 = vadd.f32 %v327, %v330
      %v335 = vrot.slane %v255, 4
      %v336 = vrot.slane %v257, 4
      %v337 = vsel %vm269, %v335, %v336
      %v339 = vadd.f32 %v332, %v337
      %v340 = vmul.f32 %v339, 0.01386
      %v341 = vadd.f32 %v321, %v340
      %v342 = vadd.f32 %v253, %v261
      %v343 = vrot.slane %v251, 2
      %v344 = vrot.slane %v253, 2
      %v345 = vsel %vm322, %v343, %v344
      %v348 = vadd.f32 %v283, %v345
      %v349 = vadd.f32 %v342, %v344
      %v350 = vrot.slane %v259, 2
      %v351 = vrot.slane %v261, 2
      %v352 = vsel %vm322, %v350, %v351
      %v355 = vadd.f32 %v348, %v352
      %v356 = vadd.f32 %v349, %v351
      %v357 = vmul.f32 %v355, 0.0557
      %v358 = vmul.f32 %v356, 0.0557
      %v361 = vrot.slane %v357, 1
      %v362 = vrot.slane %v358, 1
      %v363 = vsel %vm284, %v361, %v362
      %v365 = vadd.f32 %v341, %v363
      %v366 = vrot.slane %v251, 1
      %v367 = vrot.slane %v253, 1
      %v368 = vsel %vm284, %v366, %v367
      %v371 = vadd.f32 %v255, %v368
      %v372 = vadd.f32 %v257, %v367
      %v373 = vrot.slane %v259, 1
      %v374 = vrot.slane %v261, 1
      %v375 = vsel %vm284, %v373, %v374
      %v378 = vadd.f32 %v371, %v375
      %v379 = vadd.f32 %v372, %v374
      %v380 = vrot.slane %v255, 2
      %v381 = vrot.slane %v257, 2
      %v382 = vsel %vm322, %v380, %v381
      %v385 = vadd.f32 %v378, %v382
      %v386 = vadd.f32 %v379, %v381
      %v387 = vmul.f32 %v385, 0.110656
      %v388 = vmul.f32 %v386, 0.110656
      %v391 = vrot.slane %v387, 1
      %v392 = vrot.slane %v388, 1
      %v393 = vsel %vm284, %v391, %v392
      %v395 = vadd.f32 %v365, %v393
      %v396 = vmul.f32 %v255, 0.219833
      %v397 = vmul.f32 %v257, 0.219833
      %v400 = vrot.slane %v396, 2
      %v401 = vrot.slane %v397, 2
      %v402 = vsel %vm322, %v400, %v401
      %v404 = vadd.f32 %v395, %v402
      %405 = vst [vmem:[%s246] sm:$0xff] %v404
      %v406 = vld [vmem:[%s220 + $0x8] sm:$0xff]
      %v407 = vld [vmem:[%s235] sm:$0xf]
      %408 = vrot.lane.b32.xlu0 %v406, 127
      %v409 = vpop.permute.xlu0 %408
      %410 = vrot.lane.b32.xlu0 %v407, 127
      %v411 = vpop.permute.xlu0 %410
      %412 = vrot.lane.b32.xlu0 %v406, 126
      %v413 = vpop.permute.xlu0 %412
      %414 = vrot.lane.b32.xlu0 %v407, 126
      %v415 = vpop.permute.xlu0 %414
      %416 = vrot.lane.b32.xlu0 %v406, 125
      %v417 = vpop.permute.xlu0 %416
      %418 = vrot.lane.b32.xlu0 %v407, 125
      %v419 = vpop.permute.xlu0 %418
      %420 = vrot.lane.b32.xlu0 %v406, 124
      %v421 = vpop.permute.xlu0 %420
      %422 = vrot.lane.b32.xlu0 %v407, 124
      %v423 = vpop.permute.xlu0 %422
      %v424 = vadd.f32 %v406, %v421
      %v427 = vrot.slane %v406, 4
      %v428 = vrot.slane %v407, 4
      %v429 = vsel %vm269, %v427, %v428
      %v431 = vadd.f32 %v424, %v429
      %v434 = vrot.slane %v421, 4
      %v435 = vrot.slane %v423, 4
      %v436 = vsel %vm269, %v434, %v435
      %v438 = vadd.f32 %v431, %v436
      %v439 = vmul.f32 %v438, 0.000874
      %v440 = vadd.f32 %v409, %v417
      %v441 = vrot.slane %v406, 1
      %v442 = vrot.slane %v407, 1
      %v443 = vsel %vm284, %v441, %v442
      %v445 = vadd.f32 %v440, %v443
      %v446 = vrot.slane %v421, 1
      %v447 = vrot.slane %v423, 1
      %v448 = vsel %vm284, %v446, %v447
      %v450 = vadd.f32 %v445, %v448
      %v451 = vrot.slane %v406, 3
      %v452 = vrot.slane %v407, 3
      %v453 = vsel %vm295, %v451, %v452
      %v455 = vadd.f32 %v450, %v453
      %v456 = vrot.slane %v421, 3
      %v457 = vrot.slane %v423, 3
      %v458 = vsel %vm295, %v456, %v457
      %v460 = vadd.f32 %v455, %v458
      %v463 = vrot.slane %v409, 4
      %v464 = vrot.slane %v411, 4
      %v465 = vsel %vm269, %v463, %v464
      %v467 = vadd.f32 %v460, %v465
      %v470 = vrot.slane %v417, 4
      %v471 = vrot.slane %v419, 4
      %v472 = vsel %vm269, %v470, %v471
      %v474 = vadd.f32 %v467, %v472
      %v475 = vmul.f32 %v474, 0.006976
      %v476 = vadd.f32 %v439, %v475
      %v477 = vrot.slane %v406, 2
      %v478 = vrot.slane %v407, 2
      %v479 = vsel %vm322, %v477, %v478
      %v481 = vadd.f32 %v413, %v479
      %v482 = vrot.slane %v421, 2
      %v483 = vrot.slane %v423, 2
      %v484 = vsel %vm322, %v482, %v483
      %v486 = vadd.f32 %v481, %v484
      %v489 = vrot.slane %v413, 4
      %v490 = vrot.slane %v415, 4
      %v491 = vsel %vm269, %v489, %v490
      %v493 = vadd.f32 %v486, %v491
      %v494 = vmul.f32 %v493, 0.01386
      %v495 = vadd.f32 %v476, %v494
      %v496 = vadd.f32 %v411, %v419
      %v497 = vrot.slane %v409, 2
      %v498 = vrot.slane %v411, 2
      %v499 = vsel %vm322, %v497, %v498
      %v502 = vadd.f32 %v440, %v499
      %v503 = vadd.f32 %v496, %v498
      %v504 = vrot.slane %v417, 2
      %v505 = vrot.slane %v419, 2
      %v506 = vsel %vm322, %v504, %v505
      %v509 = vadd.f32 %v502, %v506
      %v510 = vadd.f32 %v503, %v505
      %v511 = vmul.f32 %v509, 0.0557
      %v512 = vmul.f32 %v510, 0.0557
      %v515 = vrot.slane %v511, 1
      %v516 = vrot.slane %v512, 1
      %v517 = vsel %vm284, %v515, %v516
      %v519 = vadd.f32 %v495, %v517
      %v520 = vrot.slane %v409, 1
      %v521 = vrot.slane %v411, 1
      %v522 = vsel %vm284, %v520, %v521
      %v525 = vadd.f32 %v413, %v522
      %v526 = vadd.f32 %v415, %v521
      %v527 = vrot.slane %v417, 1
      %v528 = vrot.slane %v419, 1
      %v529 = vsel %vm284, %v527, %v528
      %v532 = vadd.f32 %v525, %v529
      %v533 = vadd.f32 %v526, %v528
      %v534 = vrot.slane %v413, 2
      %v535 = vrot.slane %v415, 2
      %v536 = vsel %vm322, %v534, %v535
      %v539 = vadd.f32 %v532, %v536
      %v540 = vadd.f32 %v533, %v535
      %v541 = vmul.f32 %v539, 0.110656
      %v542 = vmul.f32 %v540, 0.110656
      %v545 = vrot.slane %v541, 1
      %v546 = vrot.slane %v542, 1
      %v547 = vsel %vm284, %v545, %v546
      %v549 = vadd.f32 %v519, %v547
      %v550 = vmul.f32 %v413, 0.219833
      %v551 = vmul.f32 %v415, 0.219833
      %v554 = vrot.slane %v550, 2
      %v555 = vrot.slane %v551, 2
      %v556 = vsel %vm322, %v554, %v555
      %v558 = vadd.f32 %v549, %v556
      %559 = vst [vmem:[%s246 + $0x8] sm:$0xff] %v558
      %s560 = smul.u32 2, %s18
      %p561 = scmp.lt.s32.totalorder %s17, 1
      %s562 = scalar_select %p561, %s17, 1
      %p563 = scmp.lt.s32.totalorder %s560, 1
      %s564 = scalar_select %p563, %s560, 1
      %s565 = smul.addr %s562, 2
      %s566 = sadd.s32 %s564, %s565
      %s567 = smul.addr %s566, 8
      %s568 = scalar_lea.vmem %s2, %s567
      // Predicated region
      $region29: #{gauss_smooth.1} parent=27 // pred_check
        %p569 = pneg %p105
      $region30: #{gauss_smooth.1} parent=27 // pred_check_branch
        %571 = sbr.rel (%p569) target = $region32
      $region31: #{gauss_smooth.1} parent=27 // pred_region
        %s572 = smul.u32 2, %s18
      $region32: #{gauss_smooth.1} parent=27 // pred_fallthru
        _
    $region28: #{gauss_smooth.1} parent=5 // pred_fallthru
      _
    %p573 = scmp.le.s32.totalorder 2, %s8
    // Predicated region
    $region33: #{gauss_smooth.1} parent=5 // pred_check
      %p574 = pneg %p573
    $region34: #{gauss_smooth.1} parent=5 // pred_check_branch
      %576 = sbr.rel (%p574) target = $region36
    $region35: #{gauss_smooth.1} parent=5 // pred_region
      %s577 = ssub.s32 %s8, 2
      // Predicated region
      $region37: #{gauss_smooth.1} parent=35 // pred_check
        %p578 = pneg %p111
      $region38: #{gauss_smooth.1} parent=35 // pred_check_branch
        %580 = sbr.rel (%p578) target = $region40
      $region39: #{gauss_smooth.1} parent=35 // pred_region
        %s581 = smul.u32 2, %s20
        %p582 = scmp.lt.s32.totalorder %s19, 1
        %s583 = scalar_select %p582, %s19, 1
        %p584 = scmp.lt.s32.totalorder %s581, 1
        %s585 = scalar_select %p584, %s581, 1
        %s586 = smul.addr %s583, 2
        %s587 = sadd.s32 %s585, %s586
        %s588 = smul.addr %s587, 8
        %s589 = scalar_lea.vmem %s2, %s588
      $region40: #{gauss_smooth.1} parent=35 // pred_fallthru
        _
    $region36: #{gauss_smooth.1} parent=5 // pred_fallthru
      _
  $region6: #{gauss_smooth.1} parent=0 // loop_footer
    %s12 = sadd.s32 1, %s8
  $region7: #{gauss_smooth.1} parent=0 // loop_footer_branch
    %7 = sbr.rel target = $region3
  $region8: #{gauss_smooth.1} parent=0 // loop_exit
    _

</llo_original>
